<compile_context>
chip_gen: v7x
topology: tpu7x:2x2x1
jax: 0.10.0
libtpu: 0.0.40
codegen_flags: <defaults>
</compile_context>

<pallas_src>
import functools
import math

import jax
import jax.numpy as jnp
from jax.experimental import pallas as pl
from jax.experimental.pallas import tpu as pltpu

LOG_STD_MAX = 2.0
LOG_STD_MIN = -20.0

_MAX_TILE_B = 1024  # per-tile batch cap; ~1 MiB/stream f32, far under VMEM


def _round_up(x, m):
    return ((x + m - 1) // m) * m


def _cdiv(a, b):
    return -(-a // b)


def _choose_tiling(B):
    """Pick (tile_b, n_tiles) from the batch size.

    Tiny batches: one tile (no grid-step overhead).  Larger batches: an even
    number of tiles (balanced across v7x's two TCs), each capped at
    _MAX_TILE_B rows to amortize per-step overhead on single-TC chips.
    """
    B8 = _round_up(max(B, 1), 8)
    if B8 <= 128:
        return B8, 1
    n = max(2, _cdiv(B8, _MAX_TILE_B))
    if n % 2:
        n += 1
    tile_b = _round_up(_cdiv(B8, n), 8)
    return tile_b, n


def _actor_kernel(obs_ref, w0_ref, b0_ref, w1_ref, b1_ref, wh_ref, bh_ref,
                  *rest, deterministic, act_limit, act_dim, ls_off):
    if deterministic:
        act_ref, lp_ref = rest
        noise_ref = None
    else:
        noise_ref, act_ref, lp_ref = rest

    x = obs_ref[...]  # (tile_b, obs_dim) -- true obs lanes, no padding

    # MLP trunk: Linear -> ReLU -> Linear -> ReLU (output_activation == activation).
    h = jnp.dot(x, w0_ref[...], preferred_element_type=jnp.float32) + b0_ref[...]
    h = jnp.maximum(h, 0.0)
    h = jnp.dot(h, w1_ref[...], preferred_element_type=jnp.float32) + b1_ref[...]
    h = jnp.maximum(h, 0.0)

    # Fused heads: one MXU pass produces [mu | log_std]; narrow static slices.
    heads = jnp.dot(h, wh_ref[...], preferred_element_type=jnp.float32) + bh_ref[...]
    mu = heads[:, :act_dim]
    log_std = jnp.clip(heads[:, ls_off:ls_off + act_dim], LOG_STD_MIN, LOG_STD_MAX)

    half_log_2pi = 0.5 * math.log(2.0 * math.pi)
    log2 = math.log(2.0)

    if deterministic:
        a = mu
        # Normal log_prob at the mean: -log_std - 0.5*log(2*pi)
        normal_lp = -log_std - half_log_2pi
    else:
        noise = noise_ref[...]  # (tile_b, act_dim)
        a = mu + jnp.exp(log_std) * noise
        # (a - mu) / std == noise exactly; skip the subtract and the divide.
        normal_lp = -0.5 * noise * noise - log_std - half_log_2pi

    # tanh-squash correction per element: 2*(log 2 - a - softplus(-2a)), stable.
    z = -2.0 * a
    softplus_z = jnp.maximum(z, 0.0) + jnp.log1p(jnp.exp(-jnp.abs(z)))
    lp_elem = normal_lp - 2.0 * (log2 - a - softplus_z)

    lp_ref[...] = jnp.sum(lp_elem, axis=-1, keepdims=True)
    act_ref[...] = act_limit * jnp.tanh(a)


def prepare_actor_params(params):
    """One-time parameter prep: pad hidden dims to lane width, fuse heads.

    Call once and reuse; keeps per-forward-call XLA op count minimal.
    """
    w0 = jnp.asarray(params["w0"], jnp.float32)
    b0 = jnp.asarray(params["b0"], jnp.float32)
    w1 = jnp.asarray(params["w1"], jnp.float32)
    b1 = jnp.asarray(params["b1"], jnp.float32)
    w_mu = jnp.asarray(params["w_mu"], jnp.float32)
    b_mu = jnp.asarray(params["b_mu"], jnp.float32)
    w_ls = jnp.asarray(params["w_ls"], jnp.float32)
    b_ls = jnp.asarray(params["b_ls"], jnp.float32)

    obs_dim, h0 = w0.shape
    h1 = w1.shape[1]
    act_dim = w_mu.shape[1]
    h0_pad = _round_up(h0, 128)
    h1_pad = _round_up(h1, 128)
    ls_off = _round_up(act_dim, 128)  # column where log_std block starts

    def pad_cols(a, cols):
        return jnp.pad(a, ((0, 0), (0, cols - a.shape[1])))

    def pad_mat(a, rows, cols):
        return jnp.pad(a, ((0, rows - a.shape[0]), (0, cols - a.shape[1])))

    prep = {
        # Layer 0 keeps its true contraction dim (obs_dim); only the hidden
        # (output) dim is padded to lane width.  Zero-padded cols/bias make the
        # padded hidden units exact zeros after ReLU -> numerics unchanged.
        "w0": pad_cols(w0, h0_pad),
        "b0": pad_cols(b0.reshape(1, -1), h0_pad),
        "w1": pad_mat(w1, h0_pad, h1_pad),
        "b1": pad_cols(b1.reshape(1, -1), h1_pad),
        "wh": jnp.concatenate([pad_mat(w_mu, h1_pad, ls_off),
                               pad_mat(w_ls, h1_pad, ls_off)], axis=1),
        "bh": jnp.concatenate([pad_cols(b_mu.reshape(1, -1), ls_off),
                               pad_cols(b_ls.reshape(1, -1), ls_off)], axis=1),
        "dims": (int(obs_dim), int(act_dim), int(ls_off)),  # static ints
    }
    return prep


def squashed_gaussian_actor(obs, prep, noise=None, *, act_limit,
                            deterministic=False):
    """Actor forward pass. Returns (pi_action: (B, act_dim), logp_pi: (B,))."""
    obs = jnp.asarray(obs, jnp.float32)
    B = obs.shape[0]
    obs_dim, act_dim, ls_off = prep["dims"]

    tile_b, n_tiles = _choose_tiling(B)
    B_pad = tile_b * n_tiles

    if B_pad != B:
        obs = jnp.pad(obs, ((0, B_pad - B), (0, 0)))

    # Weights/biases: constant index_map -> fetched once, VMEM-resident for
    # the whole grid (no per-step re-DMA).
    def resident(a):
        return pl.BlockSpec(a.shape, lambda i: (0, 0))

    inputs = [obs, prep["w0"], prep["b0"], prep["w1"], prep["b1"],
              prep["wh"], prep["bh"]]
    in_specs = [pl.BlockSpec((tile_b, obs_dim), lambda i: (i, 0)),
                resident(prep["w0"]), resident(prep["b0"]),
                resident(prep["w1"]), resident(prep["b1"]),
                resident(prep["wh"]), resident(prep["bh"])]

    if not deterministic:
        noise = jnp.asarray(noise, jnp.float32)
        if B_pad != B:
            noise = jnp.pad(noise, ((0, B_pad - B), (0, 0)))
        inputs.append(noise)
        in_specs.append(pl.BlockSpec((tile_b, act_dim), lambda i: (i, 0)))

    kernel = functools.partial(
        _actor_kernel, deterministic=deterministic,
        act_limit=float(act_limit), act_dim=act_dim, ls_off=ls_off)

    out_a, out_lp = pl.pallas_call(
        kernel,
        out_shape=(jax.ShapeDtypeStruct((B_pad, act_dim), jnp.float32),
                   jax.ShapeDtypeStruct((B_pad, 1), jnp.float32)),
        grid=(n_tiles,),
        in_specs=in_specs,
        out_specs=(pl.BlockSpec((tile_b, act_dim), lambda i: (i, 0)),
                   pl.BlockSpec((tile_b, 1), lambda i: (i, 0))),
        compiler_params=pltpu.CompilerParams(
            dimension_semantics=("parallel",)),
    )(*inputs)

    if B_pad != B:
        out_a = out_a[:B]
        out_lp = out_lp[:B]
    return out_a, out_lp[:, 0]


def init_params(key, obs_dim, hidden_sizes, act_dim):
    """Deterministic synthetic parameters (PyTorch-Linear shapes, transposed)."""
    ks = jax.random.split(key, 8)
    h0, h1 = hidden_sizes

    def lin(kw, kb, fan_in, fan_out):
        bound = 1.0 / math.sqrt(fan_in)
        w = jax.random.uniform(kw, (fan_in, fan_out), jnp.float32, -bound, bound)
        b = jax.random.uniform(kb, (fan_out,), jnp.float32, -bound, bound)
        return w, b

    w0, b0 = lin(ks[0], ks[1], obs_dim, h0)
    w1, b1 = lin(ks[2], ks[3], h0, h1)
    w_mu, b_mu = lin(ks[4], ks[5], h1, act_dim)
    w_ls, b_ls = lin(ks[6], ks[7], h1, act_dim)
    return {"w0": w0, "b0": b0, "w1": w1, "b1": b1,
            "w_mu": w_mu, "b_mu": b_mu, "w_ls": w_ls, "b_ls": b_ls}


def reference_forward(obs, params, noise, act_limit, deterministic=False):
    """Pure-JAX reference mirroring the PyTorch forward (for a sanity check)."""
    h = jax.nn.relu(obs @ params["w0"] + params["b0"])
    h = jax.nn.relu(h @ params["w1"] + params["b1"])
    mu = h @ params["w_mu"] + params["b_mu"]
    log_std = jnp.clip(h @ params["w_ls"] + params["b_ls"],
                       LOG_STD_MIN, LOG_STD_MAX)
    std = jnp.exp(log_std)
    a = mu if deterministic else mu + std * noise
    lp = jnp.sum(-0.5 * ((a - mu) / std) ** 2 - log_std
                 - 0.5 * math.log(2 * math.pi), axis=-1)
    lp -= jnp.sum(2.0 * (math.log(2.0) - a - jax.nn.softplus(-2.0 * a)), axis=-1)
    return act_limit * jnp.tanh(a), lp


if __name__ == "__main__":
    obs_dim, act_dim = 16, 8
    hidden_sizes = (64, 64)
    act_limit = 1.5

    key = jax.random.PRNGKey(0)
    k_params, k_obs, k_noise, k_obs2, k_noise2 = jax.random.split(key, 5)

    params = init_params(k_params, obs_dim, hidden_sizes, act_dim)
    prep = prepare_actor_params(params)          # one-time prep, reused below
    jax.block_until_ready(prep["wh"])

    # 1) Small batch, stochastic (rsample) path: single tile, no batch padding.
    B = 8
    obs = jax.random.normal(k_obs, (B, obs_dim), jnp.float32)
    noise = jax.random.normal(k_noise, (B, act_dim), jnp.float32)
    pi_action, logp_pi = squashed_gaussian_actor(
        obs, prep, noise, act_limit=act_limit, deterministic=False)
    jax.block_until_ready((pi_action, logp_pi))
    ref_a, ref_lp = reference_forward(obs, params, noise, act_limit)
    assert pi_action.shape == (B, act_dim) and logp_pi.shape == (B,)
    assert jnp.allclose(pi_action, ref_a, atol=1e-5, rtol=1e-5)
    assert jnp.allclose(logp_pi, ref_lp, atol=1e-4, rtol=1e-4)

    # 2) Deterministic path (noise input is not DMA'd at all).
    det_a, det_lp = squashed_gaussian_actor(
        obs, prep, act_limit=act_limit, deterministic=True)
    jax.block_until_ready((det_a, det_lp))
    ref_da, ref_dlp = reference_forward(obs, params, None, act_limit,
                                        deterministic=True)
    assert jnp.allclose(det_a, ref_da, atol=1e-5, rtol=1e-5)
    assert jnp.allclose(det_lp, ref_dlp, atol=1e-4, rtol=1e-4)

    # 3) Larger batch: even tile count (2 x 264) so both v7x TCs get a tile,
    #    resident weights, minimal row padding (520 -> 528).
    B2 = 520
    obs2 = jax.random.normal(k_obs2, (B2, obs_dim), jnp.float32)
    noise2 = jax.random.normal(k_noise2, (B2, act_dim), jnp.float32)
    a2, lp2 = squashed_gaussian_actor(
        obs2, prep, noise2, act_limit=act_limit, deterministic=False)
    jax.block_until_ready((a2, lp2))
    ref_a2, ref_lp2 = reference_forward(obs2, params, noise2, act_limit)
    assert jnp.allclose(a2, ref_a2, atol=1e-5, rtol=1e-5)
    assert jnp.allclose(lp2, ref_lp2, atol=1e-4, rtol=1e-4)

    print("KERNEL_OK")
</pallas_src>

<mosaic_0001>
module attributes {stable_mosaic.version = 11 : i64} {
  func.func @_actor_kernel(%arg0: i32, %arg1: memref<8x16xf32, #tpu.memory_space<vmem>>, %arg2: memref<16x128xf32, #tpu.memory_space<vmem>>, %arg3: memref<1x128xf32, #tpu.memory_space<vmem>>, %arg4: memref<128x128xf32, #tpu.memory_space<vmem>>, %arg5: memref<1x128xf32, #tpu.memory_space<vmem>>, %arg6: memref<128x256xf32, #tpu.memory_space<vmem>>, %arg7: memref<1x256xf32, #tpu.memory_space<vmem>>, %arg8: memref<8x8xf32, #tpu.memory_space<vmem>>, %arg9: memref<8x8xf32, #tpu.memory_space<vmem>>, %arg10: memref<8x1xf32, #tpu.memory_space<vmem>>) attributes {dimension_semantics = [#tpu.dimension_semantics<parallel>], iteration_bounds = array<i64: 1>, scalar_prefetch = 0 : i64, scratch_operands = 0 : i64, tpu.core_type = #tpu.core_type<tc>, window_params = [{transform_indices = @transform_0, window_bounds = array<i64: 8, 16>}, {pipeline_mode = #tpu.pipeline_mode<synchronous>, transform_indices = @transform_1, window_bounds = array<i64: 16, 128>}, {pipeline_mode = #tpu.pipeline_mode<synchronous>, transform_indices = @transform_2, window_bounds = array<i64: 1, 128>}, {pipeline_mode = #tpu.pipeline_mode<synchronous>, transform_indices = @transform_3, window_bounds = array<i64: 128, 128>}, {pipeline_mode = #tpu.pipeline_mode<synchronous>, transform_indices = @transform_4, window_bounds = array<i64: 1, 128>}, {pipeline_mode = #tpu.pipeline_mode<synchronous>, transform_indices = @transform_5, window_bounds = array<i64: 128, 256>}, {pipeline_mode = #tpu.pipeline_mode<synchronous>, transform_indices = @transform_6, window_bounds = array<i64: 1, 256>}, {transform_indices = @transform_7, window_bounds = array<i64: 8, 8>}, {transform_indices = @transform_8, window_bounds = array<i64: 8, 8>}, {transform_indices = @transform_9, window_bounds = array<i64: 8, 1>}]} {
    %c0 = arith.constant 0 : index
    %c0_0 = arith.constant 0 : index
    %0 = vector.load %arg1[%c0, %c0_0] : memref<8x16xf32, #tpu.memory_space<vmem>>, vector<8x16xf32>
    %c0_1 = arith.constant 0 : index
    %c0_2 = arith.constant 0 : index
    %1 = vector.load %arg2[%c0_1, %c0_2] : memref<16x128xf32, #tpu.memory_space<vmem>>, vector<16x128xf32>
    %cst = arith.constant dense<0.000000e+00> : vector<8x128xf32>
    %2 = tpu.matmul %0, %1, %cst {dimension_numbers = #tpu.dot_dimension_numbers<[1], [0], [0], [1], [0, 0, 1, 1], [], []>} : vector<8x16xf32>, vector<16x128xf32>, vector<8x128xf32> -> vector<8x128xf32>
    %c0_3 = arith.constant 0 : index
    %c0_4 = arith.constant 0 : index
    %3 = vector.load %arg3[%c0_3, %c0_4] : memref<1x128xf32, #tpu.memory_space<vmem>>, vector<1x128xf32>
    %4 = vector.broadcast %3 : vector<1x128xf32> to vector<8x128xf32>
    %5 = arith.addf %2, %4 : vector<8x128xf32>
    %cst_5 = arith.constant 0.000000e+00 : f32
    %6 = vector.broadcast %cst_5 : f32 to vector<8x128xf32>
    %7 = arith.maximumf %5, %6 : vector<8x128xf32>
    %c0_6 = arith.constant 0 : index
    %c0_7 = arith.constant 0 : index
    %8 = vector.load %arg4[%c0_6, %c0_7] : memref<128x128xf32, #tpu.memory_space<vmem>>, vector<128x128xf32>
    %cst_8 = arith.constant dense<0.000000e+00> : vector<8x128xf32>
    %9 = tpu.matmul %7, %8, %cst_8 {dimension_numbers = #tpu.dot_dimension_numbers<[1], [0], [0], [1], [0, 0, 1, 1], [], []>} : vector<8x128xf32>, vector<128x128xf32>, vector<8x128xf32> -> vector<8x128xf32>
    %c0_9 = arith.constant 0 : index
    %c0_10 = arith.constant 0 : index
    %10 = vector.load %arg5[%c0_9, %c0_10] : memref<1x128xf32, #tpu.memory_space<vmem>>, vector<1x128xf32>
    %11 = vector.broadcast %10 : vector<1x128xf32> to vector<8x128xf32>
    %12 = arith.addf %9, %11 : vector<8x128xf32>
    %cst_11 = arith.constant 0.000000e+00 : f32
    %13 = vector.broadcast %cst_11 : f32 to vector<8x128xf32>
    %14 = arith.maximumf %12, %13 : vector<8x128xf32>
    %c0_12 = arith.constant 0 : index
    %c0_13 = arith.constant 0 : index
    %15 = vector.load %arg6[%c0_12, %c0_13] : memref<128x256xf32, #tpu.memory_space<vmem>>, vector<128x256xf32>
    %cst_14 = arith.constant dense<0.000000e+00> : vector<8x256xf32>
    %16 = tpu.matmul %14, %15, %cst_14 {dimension_numbers = #tpu.dot_dimension_numbers<[1], [0], [0], [1], [0, 0, 1, 1], [], []>} : vector<8x128xf32>, vector<128x256xf32>, vector<8x256xf32> -> vector<8x256xf32>
    %c0_15 = arith.constant 0 : index
    %c0_16 = arith.constant 0 : index
    %17 = vector.load %arg7[%c0_15, %c0_16] : memref<1x256xf32, #tpu.memory_space<vmem>>, vector<1x256xf32>
    %18 = vector.broadcast %17 : vector<1x256xf32> to vector<8x256xf32>
    %19 = arith.addf %16, %18 : vector<8x256xf32>
    %20 = vector.extract_strided_slice %19 {offsets = [0, 0], sizes = [8, 8], strides = [1, 1]} : vector<8x256xf32> to vector<8x8xf32>
    %21 = vector.extract_strided_slice %19 {offsets = [0, 128], sizes = [8, 8], strides = [1, 1]} : vector<8x256xf32> to vector<8x8xf32>
    %cst_17 = arith.constant -2.000000e+01 : f32
    %cst_18 = arith.constant 2.000000e+00 : f32
    %22 = vector.broadcast %cst_17 : f32 to vector<8x8xf32>
    %23 = arith.maximumf %22, %21 : vector<8x8xf32>
    %24 = vector.broadcast %cst_18 : f32 to vector<8x8xf32>
    %25 = arith.minimumf %24, %23 : vector<8x8xf32>
    %c0_19 = arith.constant 0 : index
    %c0_20 = arith.constant 0 : index
    %26 = vector.load %arg8[%c0_19, %c0_20] : memref<8x8xf32, #tpu.memory_space<vmem>>, vector<8x8xf32>
    %27 = math.exp %25 : vector<8x8xf32>
    %28 = arith.mulf %27, %26 : vector<8x8xf32>
    %29 = arith.addf %20, %28 : vector<8x8xf32>
    %cst_21 = arith.constant -5.000000e-01 : f32
    %30 = vector.broadcast %cst_21 : f32 to vector<8x8xf32>
    %31 = arith.mulf %30, %26 : vector<8x8xf32>
    %32 = arith.mulf %31, %26 : vector<8x8xf32>
    %33 = arith.subf %32, %25 : vector<8x8xf32>
    %cst_22 = arith.constant 0.918938517 : f32
    %34 = vector.broadcast %cst_22 : f32 to vector<8x8xf32>
    %35 = arith.subf %33, %34 : vector<8x8xf32>
    %cst_23 = arith.constant -2.000000e+00 : f32
    %36 = vector.broadcast %cst_23 : f32 to vector<8x8xf32>
    %37 = arith.mulf %36, %29 : vector<8x8xf32>
    %cst_24 = arith.constant 0.000000e+00 : f32
    %38 = vector.broadcast %cst_24 : f32 to vector<8x8xf32>
    %39 = arith.maximumf %37, %38 : vector<8x8xf32>
    %40 = math.absf %37 : vector<8x8xf32>
    %cst_25 = arith.constant 0.000000e+00 : f32
    %41 = vector.broadcast %cst_25 : f32 to vector<8x8xf32>
    %42 = arith.subf %41, %40 : vector<8x8xf32>
    %43 = math.exp %42 : vector<8x8xf32>
    %44 = math.log1p %43 : vector<8x8xf32>
    %45 = arith.addf %39, %44 : vector<8x8xf32>
    %cst_26 = arith.constant 0.693147182 : f32
    %46 = vector.broadcast %cst_26 : f32 to vector<8x8xf32>
    %47 = arith.subf %46, %29 : vector<8x8xf32>
    %48 = arith.subf %47, %45 : vector<8x8xf32>
    %cst_27 = arith.constant 2.000000e+00 : f32
    %49 = vector.broadcast %cst_27 : f32 to vector<8x8xf32>
    %50 = arith.mulf %49, %48 : vector<8x8xf32>
    %51 = arith.subf %35, %50 : vector<8x8xf32>
    %cst_28 = arith.constant dense<0.000000e+00> : vector<8xf32>
    %52 = vector.multi_reduction <add>, %51, %cst_28 [1] : vector<8x8xf32> to vector<8xf32>
    %53 = vector.shape_cast %52 : vector<8xf32> to vector<8x1xf32>
    %c0_29 = arith.constant 0 : index
    %c0_30 = arith.constant 0 : index
    %54 = vector.load %arg10[%c0_29, %c0_30] : memref<8x1xf32, #tpu.memory_space<vmem>>, vector<8x1xf32>
    tpu.vector_store %arg10[%c0_29, %c0_30], %53 {strides = array<i32>} : memref<8x1xf32, #tpu.memory_space<vmem>>, vector<8x1xf32>,
    %55 = math.tanh %29 : vector<8x8xf32>
    %cst_31 = arith.constant 1.500000e+00 : f32
    %56 = vector.broadcast %cst_31 : f32 to vector<8x8xf32>
    %57 = arith.mulf %56, %55 : vector<8x8xf32>
    %c0_32 = arith.constant 0 : index
    %c0_33 = arith.constant 0 : index
    %58 = vector.load %arg9[%c0_32, %c0_33] : memref<8x8xf32, #tpu.memory_space<vmem>>, vector<8x8xf32>
    tpu.vector_store %arg9[%c0_32, %c0_33], %57 {strides = array<i32>} : memref<8x8xf32, #tpu.memory_space<vmem>>, vector<8x8xf32>,
    return
  }
  func.func @transform_0(%arg0: i32) -> (i32, i32) {
    %c0_i32 = arith.constant 0 : i32
    %c0_i32_0 = arith.constant 0 : i32
    return %arg0, %c0_i32 : i32, i32
  }
  func.func @transform_1(%arg0: i32) -> (i32, i32) {
    %c0_i32 = arith.constant 0 : i32
    %c0_i32_0 = arith.constant 0 : i32
    %c0_i32_1 = arith.constant 0 : i32
    return %c0_i32, %c0_i32_0 : i32, i32
  }
  func.func @transform_2(%arg0: i32) -> (i32, i32) {
    %c0_i32 = arith.constant 0 : i32
    %c0_i32_0 = arith.constant 0 : i32
    %c0_i32_1 = arith.constant 0 : i32
    return %c0_i32, %c0_i32_0 : i32, i32
  }
  func.func @transform_3(%arg0: i32) -> (i32, i32) {
    %c0_i32 = arith.constant 0 : i32
    %c0_i32_0 = arith.constant 0 : i32
    %c0_i32_1 = arith.constant 0 : i32
    return %c0_i32, %c0_i32_0 : i32, i32
  }
  func.func @transform_4(%arg0: i32) -> (i32, i32) {
    %c0_i32 = arith.constant 0 : i32
    %c0_i32_0 = arith.constant 0 : i32
    %c0_i32_1 = arith.constant 0 : i32
    return %c0_i32, %c0_i32_0 : i32, i32
  }
  func.func @transform_5(%arg0: i32) -> (i32, i32) {
    %c0_i32 = arith.constant 0 : i32
    %c0_i32_0 = arith.constant 0 : i32
    %c0_i32_1 = arith.constant 0 : i32
    return %c0_i32, %c0_i32_0 : i32, i32
  }
  func.func @transform_6(%arg0: i32) -> (i32, i32) {
    %c0_i32 = arith.constant 0 : i32
    %c0_i32_0 = arith.constant 0 : i32
    %c0_i32_1 = arith.constant 0 : i32
    return %c0_i32, %c0_i32_0 : i32, i32
  }
  func.func @transform_7(%arg0: i32) -> (i32, i32) {
    %c0_i32 = arith.constant 0 : i32
    %c0_i32_0 = arith.constant 0 : i32
    return %arg0, %c0_i32 : i32, i32
  }
  func.func @transform_8(%arg0: i32) -> (i32, i32) {
    %c0_i32 = arith.constant 0 : i32
    %c0_i32_0 = arith.constant 0 : i32
    return %arg0, %c0_i32 : i32, i32
  }
  func.func @transform_9(%arg0: i32) -> (i32, i32) {
    %c0_i32 = arith.constant 0 : i32
    %c0_i32_0 = arith.constant 0 : i32
    return %arg0, %c0_i32 : i32, i32
  }
}

</mosaic_0001>

<llo_original>
// kernel: tpu_custom_call.1
$region0: #{tpu_custom_call.1}
  #allocation0 [shape = 'u32[]', space=smem, size = 0x4, offset = 0x4, fixed_abs, tag = 'smem constant byte address 0x4 - core index']
  #allocation1 [shape = 'u32[144,128]{1,0:T(1,128)}', space=vmem, size = 0x12000, scoped, tag = 'internal scratch']
  %s0 = inlined_call_operand.hbm [shape: f32[8,16], index: 0, kind: input, shape index: {}]
  %s1 = inlined_call_operand.hbm [shape: f32[16,128], index: 1, kind: input, shape index: {}]
  %s2 = inlined_call_operand.vmem [shape: f32[1,128], index: 2, kind: input, shape index: {}]
  %s3 = inlined_call_operand.hbm [shape: f32[128,128], index: 3, kind: input, shape index: {}]
  %s4 = inlined_call_operand.vmem [shape: f32[1,128], index: 4, kind: input, shape index: {}]
  %s5 = inlined_call_operand.hbm [shape: f32[128,256], index: 5, kind: input, shape index: {}]
  %s6 = inlined_call_operand.vmem [shape: f32[1,256], index: 6, kind: input, shape index: {}]
  %s7 = inlined_call_operand.vmem [shape: f32[8,8], index: 7, kind: input, shape index: {}]
  %s8 = inlined_call_operand.hbm [shape: f32[8,8], index: 8, kind: output, shape index: {0}]
  %s9 = inlined_call_operand.vmem [shape: f32[8,1], index: 9, kind: output, shape index: {1}]
  %10 = xla_tuple %s8, %s9
  %s11 = sld [smem:[#allocation0]]
  $region66: #{tpu_custom_call.1} parent=0
    _
  %s13 = ssub.s32 1, %s11
  %s14 = scalar_select 0, %s13, %s11
  $region1: #{tpu_custom_call.1} parent=0
    #allocation2 [shape = 'u8[4096]{0}', space=vmem, size = 0x1000, scoped, tag = 'input window, operand 0, single buffered']
    #allocation3 [shape = 's32[1]{0}', space=sflag, size = 0x4, scoped, tag = 'scoped memory for tpu_custom_call.1']
    #allocation4 [shape = 's32[1]{0}', space=sflag, size = 0x4, scoped, tag = 'scoped memory for tpu_custom_call.1']
    #allocation5 [shape = 'u8[8192]{0}', space=vmem, size = 0x2000, scoped, tag = 'input window, operand 1, single buffered']
    #allocation6 [shape = 's32[1]{0}', space=sflag, size = 0x4, scoped, tag = 'scoped memory for tpu_custom_call.1']
    #allocation7 [shape = 'u8[65536]{0}', space=vmem, size = 0x10000, scoped, tag = 'input window, operand 3, single buffered']
    #allocation8 [shape = 'u8[131072]{0}', space=vmem, size = 0x20000, scoped, tag = 'input window, operand 5, single buffered']
    #allocation9 [shape = 's32[1]{0}', space=sflag, size = 0x4, scoped, tag = 'scoped memory for tpu_custom_call.1']
    #allocation10 [shape = 'u8[4096]{0}', space=vmem, size = 0x1000, scoped, tag = 'output window, operand 0, single buffered']
    %15 = vsyncpa [#allocation3], 0
    %16 = vsyncpa [#allocation6], 0
    %17 = vsyncpa [#allocation9], 0
    %18 = vsyncpa [#allocation4], 0
    // Predicated region
    $region2: #{tpu_custom_call.1} parent=1 // pred_check
      _
    $region3: #{tpu_custom_call.1} parent=1 // pred_check_branch
      %20 = sbr.rel (0) target = $region5
    $region4: #{tpu_custom_call.1} parent=1 // pred_region
      %s22 = ssub.s32 128, 128
      %23 = vsyncadd [#allocation3], %s22
      %s25 = sshll.u32 [#allocation2], 4
      %s26 = int_to_ptr.vmem [resolvable:$true] %s25
      %28 = dma.hbm_to_vmem [thread:$0]  %s0, 128, %s26, [#allocation3]
    $region5: #{tpu_custom_call.1} parent=1 // pred_fallthru
      _
    // Predicated region
    $region6: #{tpu_custom_call.1} parent=1 // pred_check
      _
    $region7: #{tpu_custom_call.1} parent=1 // pred_check_branch
      %30 = sbr.rel (0) target = $region9
    $region8: #{tpu_custom_call.1} parent=1 // pred_region
      %s32 = ssub.s32 256, 256
      %33 = vsyncadd [#allocation6], %s32
      %s34 = sshll.u32 [#allocation5], 4
      %s35 = int_to_ptr.vmem [resolvable:$true] %s34
      %40 = dma.hbm_to_vmem [thread:$0]  %s1, 256, %s35, [#allocation6], 128, 128, 8
    $region9: #{tpu_custom_call.1} parent=1 // pred_fallthru
      _
    // Predicated region
    $region10: #{tpu_custom_call.1} parent=1 // pred_check
      _
    $region11: #{tpu_custom_call.1} parent=1 // pred_check_branch
      %42 = sbr.rel (0) target = $region13
    $region12: #{tpu_custom_call.1} parent=1 // pred_region
      _
    $region13: #{tpu_custom_call.1} parent=1 // pred_fallthru
      _
    // Predicated region
    $region14: #{tpu_custom_call.1} parent=1 // pred_check
      _
    $region15: #{tpu_custom_call.1} parent=1 // pred_check_branch
      %44 = sbr.rel (0) target = $region17
    $region16: #{tpu_custom_call.1} parent=1 // pred_region
      %s46 = ssub.s32 2048, 2048
      %47 = vsyncadd [#allocation6], %s46
      %s48 = sshll.u32 [#allocation7], 4
      %s49 = int_to_ptr.vmem [resolvable:$true] %s48
      %54 = dma.hbm_to_vmem [thread:$0]  %s3, 2048, %s49, [#allocation6], 128, 128, 8
    $region17: #{tpu_custom_call.1} parent=1 // pred_fallthru
      _
    // Predicated region
    $region18: #{tpu_custom_call.1} parent=1 // pred_check
      _
    $region19: #{tpu_custom_call.1} parent=1 // pred_check_branch
      %56 = sbr.rel (0) target = $region21
    $region20: #{tpu_custom_call.1} parent=1 // pred_region
      _
    $region21: #{tpu_custom_call.1} parent=1 // pred_fallthru
      _
    // Predicated region
    $region22: #{tpu_custom_call.1} parent=1 // pred_check
      _
    $region23: #{tpu_custom_call.1} parent=1 // pred_check_branch
      %58 = sbr.rel (0) target = $region25
    $region24: #{tpu_custom_call.1} parent=1 // pred_region
      %s60 = ssub.s32 4096, 4096
      %61 = vsyncadd [#allocation9], %s60
      %s62 = sshll.u32 [#allocation8], 4
      %s63 = int_to_ptr.vmem [resolvable:$true] %s62
      %68 = dma.hbm_to_vmem [thread:$0]  %s5, 4096, %s63, [#allocation9], 256, 256, 16
    $region25: #{tpu_custom_call.1} parent=1 // pred_fallthru
      _
    // Predicated region
    $region26: #{tpu_custom_call.1} parent=1 // pred_check
      _
    $region27: #{tpu_custom_call.1} parent=1 // pred_check_branch
      %70 = sbr.rel (0) target = $region29
    $region28: #{tpu_custom_call.1} parent=1 // pred_region
      _
    $region29: #{tpu_custom_call.1} parent=1 // pred_fallthru
      _
    // Predicated region
    $region30: #{tpu_custom_call.1} parent=1 // pred_check
      _
    $region31: #{tpu_custom_call.1} parent=1 // pred_check_branch
      %72 = sbr.rel (0) target = $region33
    $region32: #{tpu_custom_call.1} parent=1 // pred_region
      _
    $region33: #{tpu_custom_call.1} parent=1 // pred_fallthru
      _
    // Predicated region
    $region34: #{tpu_custom_call.1} parent=1 // pred_check
      _
    $region35: #{tpu_custom_call.1} parent=1 // pred_check_branch
      %74 = sbr.rel (0) target = $region37
    $region36: #{tpu_custom_call.1} parent=1 // pred_region
      %75 = dma.done [#allocation3], 128
    $region37: #{tpu_custom_call.1} parent=1 // pred_fallthru
      _
    // Predicated region
    $region38: #{tpu_custom_call.1} parent=1 // pred_check
      _
    $region39: #{tpu_custom_call.1} parent=1 // pred_check_branch
      %77 = sbr.rel (0) target = $region41
    $region40: #{tpu_custom_call.1} parent=1 // pred_region
      %78 = dma.done [#allocation6], 256
    $region41: #{tpu_custom_call.1} parent=1 // pred_fallthru
      _
    // Predicated region
    $region42: #{tpu_custom_call.1} parent=1 // pred_check
      _
    $region43: #{tpu_custom_call.1} parent=1 // pred_check_branch
      %80 = sbr.rel (0) target = $region45
    $region44: #{tpu_custom_call.1} parent=1 // pred_region
      %81 = dma.done [#allocation6], 2048
    $region45: #{tpu_custom_call.1} parent=1 // pred_fallthru
      _
    // Predicated region
    $region46: #{tpu_custom_call.1} parent=1 // pred_check
      _
    $region47: #{tpu_custom_call.1} parent=1 // pred_check_branch
      %83 = sbr.rel (0) target = $region49
    $region48: #{tpu_custom_call.1} parent=1 // pred_region
      %84 = dma.done [#allocation9], 4096
    $region49: #{tpu_custom_call.1} parent=1 // pred_fallthru
      _
    %v85 = vld [vmem:[#allocation2] sm:$0xff]
    %v86 = vld [vmem:[#allocation5] sm:$0xff]
    %v87 = vld [vmem:[#allocation5 + $0x8] sm:$0xff]
    %v88 = vld [vmem:[%s2] sm:$0x1]
    %v90 = vlaneseq
    %v91 = vshrl.u32 %v90, 7
    %v92 = vsub.s32 0, %v91
    %v93 = vrot.slane %v88, %v92
    %vm95 = vcmask 130048
    %v97 = vsel %vm95, %v85, 0
    %99 = vmatprep.subr.mxu0 0.0
    %100 = vmatpush1.msra.mxu0 %v86
    %101 = vmatprep.subr.mxu0 0.0
    %102 = vmatpush1.msra.mxu0 %v87
    %103 = vmatprep.subr.mxu0 0.0
    %104 = vmatpush1.msra.mxu0 0.0
    %105 = vmatprep.subr.mxu0 0.0
    %106 = vmatpush1.msra.mxu0 0.0
    %107 = vmatprep.subr.mxu0 0.0
    %108 = vmatpush1.msra.mxu0 0.0
    %109 = vmatprep.subr.mxu0 0.0
    %110 = vmatpush1.msra.mxu0 0.0
    %111 = vmatprep.subr.mxu0 0.0
    %112 = vmatpush1.msra.mxu0 0.0
    %113 = vmatprep.subr.mxu0 0.0
    %114 = vmatpush1.msra.mxu0 0.0
    %115 = vmatprep.subr.mxu0 0.0
    %116 = vmatpush1.msra.mxu0 0.0
    %117 = vmatprep.subr.mxu0 0.0
    %118 = vmatpush1.msra.mxu0 0.0
    %119 = vmatprep.subr.mxu0 0.0
    %120 = vmatpush1.msra.mxu0 0.0
    %121 = vmatprep.subr.mxu0 0.0
    %122 = vmatpush1.msra.mxu0 0.0
    %123 = vmatprep.subr.mxu0 0.0
    %124 = vmatpush1.msra.mxu0 0.0
    %125 = vmatprep.subr.mxu0 0.0
    %126 = vmatpush1.msra.mxu0 0.0
    %127 = vmatprep.subr.mxu0 0.0
    %128 = vmatpush1.msra.mxu0 0.0
    %129 = vmatprep.subr.mxu0 0.0
    %130 = vmatpush1.msra.mxu0 0.0
    %131 = vmatprep.subr.mxu0 0.0
    %132 = vmatpush1.msra.mxu0 0.0
    %133 = vmatprep.subr.mxu0 0.0
    %134 = vmatpush1.msra.mxu0 0.0
    %135 = vmatprep.subr.mxu0 0.0
    %136 = vmatpush1.msra.mxu0 0.0
    %137 = vmatprep.subr.mxu0 0.0
    %138 = vmatpush1.msra.mxu0 0.0
    %139 = vmatprep.subr.mxu0 0.0
    %140 = vmatpush1.msra.mxu0 0.0
    %141 = vmatprep.subr.mxu0 0.0
    %142 = vmatpush1.msra.mxu0 0.0
    %143 = vmatprep.subr.mxu0 0.0
    %144 = vmatpush1.msra.mxu0 0.0
    %145 = vmatprep.subr.mxu0 0.0
    %146 = vmatpush1.msra.mxu0 0.0
    %147 = vmatprep.subr.mxu0 0.0
    %148 = vmatpush1.msra.mxu0 0.0
    %149 = vmatprep.subr.mxu0 0.0
    %150 = vmatpush1.msra.mxu0 0.0
    %151 = vmatprep.subr.mxu0 0.0
    %152 = vmatpush1.msra.mxu0 0.0
    %153 = vmatprep.subr.mxu0 0.0
    %154 = vmatpush1.msra.mxu0 0.0
    %155 = vmatprep.subr.mxu0 0.0
    %156 = vmatpush1.msra.mxu0 0.0
    %157 = vmatprep.subr.mxu0 0.0
    %158 = vmatpush1.msra.mxu0 0.0
    %159 = vmatprep.subr.mxu0 0.0
    %160 = vmatpush1.msra.mxu0 0.0
    %161 = vmatprep.subr.mxu0 0.0
    %162 = vmatpush1.msra.mxu0 0.0
    %163 = vmatprep.mubr.f32.mxu0 0.0
    %164 = vmatmul.mubr.f32.gmra.mrb[0].mxu0 %v97
    %v165 = vpop.f32.mrb[0].mxu0
    %v166 = vadd.f32 %v93, %v165
    %v167 = vpop.f32.mrb[0].mxu0
    %168 = vdwg.mxu0
    %v169 = vmax.f32 %v166, 0.0
    %v170 = vld [vmem:[#allocation7] sm:$0xff]
    %v171 = vld [vmem:[#allocation7 + $0x8] sm:$0xff]
    %v172 = vld [vmem:[#allocation7 + $0x10] sm:$0xff]
    %v173 = vld [vmem:[#allocation7 + $0x18] sm:$0xff]
    %v174 = vld [vmem:[#allocation7 + $0x20] sm:$0xff]
    %v175 = vld [vmem:[#allocation7 + $0x28] sm:$0xff]
    %v176 = vld [vmem:[#allocation7 + $0x30] sm:$0xff]
    %v177 = vld [vmem:[#allocation7 + $0x38] sm:$0xff]
    %v178 = vld [vmem:[#allocation7 + $0x40] sm:$0xff]
    %v179 = vld [vmem:[#allocation7 + $0x48] sm:$0xff]
    %v180 = vld [vmem:[#allocation7 + $0x50] sm:$0xff]
    %v181 = vld [vmem:[#allocation7 + $0x58] sm:$0xff]
    %v182 = vld [vmem:[#allocation7 + $0x60] sm:$0xff]
    %v183 = vld [vmem:[#allocation7 + $0x68] sm:$0xff]
    %v184 = vld [vmem:[#allocation7 + $0x70] sm:$0xff]
    %v185 = vld [vmem:[#allocation7 + $0x78] sm:$0xff]
    %v186 = vld [vmem:[%s4] sm:$0x1]
    %v188 = vlaneseq
    %v189 = vshrl.u32 %v188, 7
    %v190 = vsub.s32 0, %v189
    %v191 = vrot.slane %v186, %v190
    %193 = vmatprep.subr.mxu0 0.0
    %194 = vmatpush1.msra.mxu0 %v170
    %195 = vmatprep.subr.mxu0 0.0
    %196 = vmatpush1.msra.mxu0 %v171
    %197 = vmatprep.subr.mxu0 0.0
    %198 = vmatpush1.msra.mxu0 %v172
    %199 = vmatprep.subr.mxu0 0.0
    %200 = vmatpush1.msra.mxu0 %v173
    %201 = vmatprep.subr.mxu0 0.0
    %202 = vmatpush1.msra.mxu0 %v174
    %203 = vmatprep.subr.mxu0 0.0
    %204 = vmatpush1.msra.mxu0 %v175
    %205 = vmatprep.subr.mxu0 0.0
    %206 = vmatpush1.msra.mxu0 %v176
    %207 = vmatprep.subr.mxu0 0.0
    %208 = vmatpush1.msra.mxu0 %v177
    %209 = vmatprep.subr.mxu0 0.0
    %210 = vmatpush1.msra.mxu0 %v178
    %211 = vmatprep.subr.mxu0 0.0
    %212 = vmatpush1.msra.mxu0 %v179
    %213 = vmatprep.subr.mxu0 0.0
    %214 = vmatpush1.msra.mxu0 %v180
    %215 = vmatprep.subr.mxu0 0.0
    %216 = vmatpush1.msra.mxu0 %v181
    %217 = vmatprep.subr.mxu0 0.0
    %218 = vmatpush1.msra.mxu0 %v182
    %219 = vmatprep.subr.mxu0 0.0
    %220 = vmatpush1.msra.mxu0 %v183
    %221 = vmatprep.subr.mxu0 0.0
    %222 = vmatpush1.msra.mxu0 %v184
    %223 = vmatprep.subr.mxu0 0.0
    %224 = vmatpush1.msra.mxu0 %v185
    %225 = vmatprep.subr.mxu0 0.0
    %226 = vmatpush1.msra.mxu0 0.0
    %227 = vmatprep.subr.mxu0 0.0
    %228 = vmatpush1.msra.mxu0 0.0
    %229 = vmatprep.subr.mxu0 0.0
    %230 = vmatpush1.msra.mxu0 0.0
    %231 = vmatprep.subr.mxu0 0.0
    %232 = vmatpush1.msra.mxu0 0.0
    %233 = vmatprep.subr.mxu0 0.0
    %234 = vmatpush1.msra.mxu0 0.0
    %235 = vmatprep.subr.mxu0 0.0
    %236 = vmatpush1.msra.mxu0 0.0
    %237 = vmatprep.subr.mxu0 0.0
    %238 = vmatpush1.msra.mxu0 0.0
    %239 = vmatprep.subr.mxu0 0.0
    %240 = vmatpush1.msra.mxu0 0.0
    %241 = vmatprep.subr.mxu0 0.0
    %242 = vmatpush1.msra.mxu0 0.0
    %243 = vmatprep.subr.mxu0 0.0
    %244 = vmatpush1.msra.mxu0 0.0
    %245 = vmatprep.subr.mxu0 0.0
    %246 = vmatpush1.msra.mxu0 0.0
    %247 = vmatprep.subr.mxu0 0.0
    %248 = vmatpush1.msra.mxu0 0.0
    %249 = vmatprep.subr.mxu0 0.0
    %250 = vmatpush1.msra.mxu0 0.0
    %251 = vmatprep.subr.mxu0 0.0
    %252 = vmatpush1.msra.mxu0 0.0
    %253 = vmatprep.subr.mxu0 0.0
    %254 = vmatpush1.msra.mxu0 0.0
    %255 = vmatprep.subr.mxu0 0.0
    %256 = vmatpush1.msra.mxu0 0.0
    %257 = vmatprep.mubr.f32.mxu0 0.0
    %258 = vmatmul.mubr.f32.gmra.mrb[0].mxu0 %v169
    %v259 = vpop.f32.mrb[0].mxu0
    %v260 = vadd.f32 %v191, %v259
    %v261 = vpop.f32.mrb[0].mxu0
    %262 = vdwg.mxu0
    %v263 = vmax.f32 %v260, 0.0
    %v264 = vld [vmem:[#allocation8] sm:$0xff]
    %v265 = vld [vmem:[#allocation8 + $0x8] sm:$0xff]
    %v266 = vld [vmem:[#allocation8 + $0x10] sm:$0xff]
    %v267 = vld [vmem:[#allocation8 + $0x18] sm:$0xff]
    %v268 = vld [vmem:[#allocation8 + $0x20] sm:$0xff]
    %v269 = vld [vmem:[#allocation8 + $0x28] sm:$0xff]
    %v270 = vld [vmem:[#allocation8 + $0x30] sm:$0xff]
    %v271 = vld [vmem:[#allocation8 + $0x38] sm:$0xff]
    %v272 = vld [vmem:[#allocation8 + $0x40] sm:$0xff]
    %v273 = vld [vmem:[#allocation8 + $0x48] sm:$0xff]
    %v274 = vld [vmem:[#allocation8 + $0x50] sm:$0xff]
    %v275 = vld [vmem:[#allocation8 + $0x58] sm:$0xff]
    %v276 = vld [vmem:[#allocation8 + $0x60] sm:$0xff]
    %v277 = vld [vmem:[#allocation8 + $0x68] sm:$0xff]
    %v278 = vld [vmem:[#allocation8 + $0x70] sm:$0xff]
    %v279 = vld [vmem:[#allocation8 + $0x78] sm:$0xff]
    %v280 = vld [vmem:[#allocation8 + $0x80] sm:$0xff]
    %v281 = vld [vmem:[#allocation8 + $0x88] sm:$0xff]
    %v282 = vld [vmem:[#allocation8 + $0x90] sm:$0xff]
    %v283 = vld [vmem:[#allocation8 + $0x98] sm:$0xff]
    %v284 = vld [vmem:[#allocation8 + $0xa0] sm:$0xff]
    %v285 = vld [vmem:[#allocation8 + $0xa8] sm:$0xff]
    %v286 = vld [vmem:[#allocation8 + $0xb0] sm:$0xff]
    %v287 = vld [vmem:[#allocation8 + $0xb8] sm:$0xff]
    %v288 = vld [vmem:[#allocation8 + $0xc0] sm:$0xff]
    %v289 = vld [vmem:[#allocation8 + $0xc8] sm:$0xff]
    %v290 = vld [vmem:[#allocation8 + $0xd0] sm:$0xff]
    %v291 = vld [vmem:[#allocation8 + $0xd8] sm:$0xff]
    %v292 = vld [vmem:[#allocation8 + $0xe0] sm:$0xff]
    %v293 = vld [vmem:[#allocation8 + $0xe8] sm:$0xff]
    %v294 = vld [vmem:[#allocation8 + $0xf0] sm:$0xff]
    %v295 = vld [vmem:[#allocation8 + $0xf8] sm:$0xff]
    %v296 = vld [vmem:[%s6] sm:$0x3]
    %v298 = vlaneseq
    %v299 = vshrl.u32 %v298, 7
    %v300 = vsub.s32 0, %v299
    %v301 = vrot.slane %v296, %v300
    %v302 = vlaneseq
    %v303 = vshrl.u32 %v302, 7
    %v304 = vsub.s32 1, %v303
    %v305 = vrot.slane %v296, %v304
    %308 = vmatprep.subr.mxu0 %v265
    %309 = vmatpush1.msra.mxu0 %v264
    %310 = vmatprep.subr.mxu0 %v267
    %311 = vmatpush1.msra.mxu0 %v266
    %312 = vmatprep.subr.mxu0 %v269
    %313 = vmatpush1.msra.mxu0 %v268
    %314 = vmatprep.subr.mxu0 %v271
    %315 = vmatpush1.msra.mxu0 %v270
    %316 = vmatprep.subr.mxu0 %v273
    %317 = vmatpush1.msra.mxu0 %v272
    %318 = vmatprep.subr.mxu0 %v275
    %319 = vmatpush1.msra.mxu0 %v274
    %320 = vmatprep.subr.mxu0 %v277
    %321 = vmatpush1.msra.mxu0 %v276
    %322 = vmatprep.subr.mxu0 %v279
    %323 = vmatpush1.msra.mxu0 %v278
    %324 = vmatprep.subr.mxu0 %v281
    %325 = vmatpush1.msra.mxu0 %v280
    %326 = vmatprep.subr.mxu0 %v283
    %327 = vmatpush1.msra.mxu0 %v282
    %328 = vmatprep.subr.mxu0 %v285
    %329 = vmatpush1.msra.mxu0 %v284
    %330 = vmatprep.subr.mxu0 %v287
    %331 = vmatpush1.msra.mxu0 %v286
    %332 = vmatprep.subr.mxu0 %v289
    %333 = vmatpush1.msra.mxu0 %v288
    %334 = vmatprep.subr.mxu0 %v291
    %335 = vmatpush1.msra.mxu0 %v290
    %336 = vmatprep.subr.mxu0 %v293
    %337 = vmatpush1.msra.mxu0 %v292
    %338 = vmatprep.subr.mxu0 %v295
    %339 = vmatpush1.msra.mxu0 %v294
    %340 = vmatprep.subr.mxu0 0.0
    %341 = vmatpush1.msra.mxu0 0.0
    %342 = vmatprep.subr.mxu0 0.0
    %343 = vmatpush1.msra.mxu0 0.0
    %344 = vmatprep.subr.mxu0 0.0
    %345 = vmatpush1.msra.mxu0 0.0
    %346 = vmatprep.subr.mxu0 0.0
    %347 = vmatpush1.msra.mxu0 0.0
    %348 = vmatprep.subr.mxu0 0.0
    %349 = vmatpush1.msra.mxu0 0.0
    %350 = vmatprep.subr.mxu0 0.0
    %351 = vmatpush1.msra.mxu0 0.0
    %352 = vmatprep.subr.mxu0 0.0
    %353 = vmatpush1.msra.mxu0 0.0
    %354 = vmatprep.subr.mxu0 0.0
    %355 = vmatpush1.msra.mxu0 0.0
    %356 = vmatprep.subr.mxu0 0.0
    %357 = vmatpush1.msra.mxu0 0.0
    %358 = vmatprep.subr.mxu0 0.0
    %359 = vmatpush1.msra.mxu0 0.0
    %360 = vmatprep.subr.mxu0 0.0
    %361 = vmatpush1.msra.mxu0 0.0
    %362 = vmatprep.subr.mxu0 0.0
    %363 = vmatpush1.msra.mxu0 0.0
    %364 = vmatprep.subr.mxu0 0.0
    %365 = vmatpush1.msra.mxu0 0.0
    %366 = vmatprep.subr.mxu0 0.0
    %367 = vmatpush1.msra.mxu0 0.0
    %368 = vmatprep.subr.mxu0 0.0
    %369 = vmatpush1.msra.mxu0 0.0
    %370 = vmatprep.subr.mxu0 0.0
    %371 = vmatpush1.msra.mxu0 0.0
    %372 = vmatprep.mubr.f32.mxu0 0.0
    %373 = vmatmul.mubr.f32.gmra.mrb[0].mxu0 %v263
    %v374 = vpop.f32.mrb[0].mxu0
    %v375 = vadd.f32 %v301, %v374
    %v376 = vpop.f32.mrb[0].mxu0
    %v377 = vadd.f32 %v305, %v376
    %378 = vdwg.mxu0
    %v379 = vmax.f32 %v377, -20.0
    %v380 = vmin.f32 %v379, 2.0
    %v381 = vld [vmem:[%s7] sm:$0xff]
    %v382 = vmul.f32 %v380, 1.442695
    %v383 = vpow.pop %v382
    %v384 = vmul.f32 %v383, %v381
    %v385 = vadd.f32 %v375, %v384
    %v386 = vmul.f32 %v381, -0.5
    %v387 = vmul.f32 %v386, %v381
    %v388 = vsub.f32 %v387, %v380
    %v389 = vsub.f32 %v388, 0.9189385
    %v390 = vmul.f32 %v385, -2.0
    %v391 = vmax.f32 %v390, 0.0
    %v392 = vand.u32 2147483647, %v390
    %v393 = vsub.f32 0.0, %v392
    %v394 = vmul.f32 %v393, 1.442695
    %v395 = vpow.pop %v394
    %v396 = vadd.f32 %v395, 1.0
    %v397 = vlog2.pop %v396
    %v398 = vmul.f32 %v397, 0.6931472
    %v399 = vmul.f32 -0.5, %v395
    %v400 = vadd.f32 %v399, 1.0
    %v401 = vmul.f32 %v400, %v395
    %v402 = vand.u32 2147483647, %v395
    %vm403 = vcmp.lt.f32.partialorder %v402, 0.0004427343
    %v404 = vsel %vm403, %v401, %v398
    %v405 = vadd.f32 %v391, %v404
    %v406 = vsub.f32 0.6931472, %v385
    %v407 = vsub.f32 %v406, %v405
    %v408 = vmul.f32 %v407, 2.0
    %v409 = vsub.f32 %v389, %v408
    %vm410 = vcmask 64512
    %v411 = vsel %vm410, %v409, 0.0
    %412 = vadd.xlane.f32.xlu0 %v411
    %v413 = vpop.xlane.xlu0 %412
    %vm414 = vcmask 7168
    %415 = vst.msk [vmem:[%s9] sm:$0xff] %vm414, %v413
    %v416 = vtanh.pop %v385
    %v417 = vmul.f32 %v416, 1.5
    %418 = vst.msk [vmem:[#allocation10] sm:$0xff] %vm410, %v417
    // Predicated region
    $region50: #{tpu_custom_call.1} parent=1 // pred_check
      _
    $region51: #{tpu_custom_call.1} parent=1 // pred_check_branch
      %420 = sbr.rel (0) target = $region53
    $region52: #{tpu_custom_call.1} parent=1 // pred_region
      %s422 = ssub.s32 128, 128
      %423 = vsyncadd [#allocation4], %s422
      %s425 = sshll.u32 [#allocation10], 4
      %s426 = int_to_ptr.vmem [resolvable:$true] %s425
      %428 = dma.vmem_to_hbm [thread:$0]  %s426, 128, %s8, [#allocation4]
    $region53: #{tpu_custom_call.1} parent=1 // pred_fallthru
      _
    // Predicated region
    $region54: #{tpu_custom_call.1} parent=1 // pred_check
      _
    $region55: #{tpu_custom_call.1} parent=1 // pred_check_branch
      %430 = sbr.rel (0) target = $region57
    $region56: #{tpu_custom_call.1} parent=1 // pred_region
      _
    $region57: #{tpu_custom_call.1} parent=1 // pred_fallthru
      _
    // Predicated region
    $region58: #{tpu_custom_call.1} parent=1 // pred_check
      _
    $region59: #{tpu_custom_call.1} parent=1 // pred_check_branch
      %432 = sbr.rel (0) target = $region61
    $region60: #{tpu_custom_call.1} parent=1 // pred_region
      %433 = dma.done [#allocation4], 128
    $region61: #{tpu_custom_call.1} parent=1 // pred_fallthru
      _
    // Predicated region
    $region62: #{tpu_custom_call.1} parent=1 // pred_check
      _
    $region63: #{tpu_custom_call.1} parent=1 // pred_check_branch
      %435 = sbr.rel (0) target = $region65
    $region64: #{tpu_custom_call.1} parent=1 // pred_region
      _
    $region65: #{tpu_custom_call.1} parent=1 // pred_fallthru
      _
    %436 = vsyncpa [#allocation3], 1
    %437 = vsyncpa [#allocation6], 1
    %438 = vsyncpa [#allocation9], 1
    %439 = vsyncpa [#allocation4], 1

</llo_original>
